<compile_context>
chip_gen: v7x
topology: tpu7x:2x2x1
jax: 0.10.0
libtpu: 0.0.40
codegen_flags: <defaults>
</compile_context>

<pallas_src>
import jax
import jax.numpy as jnp
from jax.experimental import pallas as pl
from jax.experimental.pallas import tpu as pltpu


def _round_up(x, m):
    return (x + m - 1) // m * m


def _location_kernel(w_ref, b_ref, x_ref, noise_ref, out_ref, loc_ref):
    # w: (128, 2R) block-diagonal; b: (1, 2R); x: (TG, 128);
    # noise / out / loc: (TG, 2R).
    z = jnp.dot(x_ref[...], w_ref[...], preferred_element_type=jnp.float32)
    out = jnp.tanh(z + b_ref[...])                       # bias: broadcast add
    loc = jnp.tanh(out + noise_ref[...].astype(jnp.float32))
    out_ref[...] = out.astype(out_ref.dtype)             # single full-tile store
    loc_ref[...] = loc.astype(loc_ref.dtype)


def location_net_forward(x, w, b, noise, *, block_b=16384):
    """Fused locationNet forward.

    x: (B, H), w: (2, H), b: (2,), noise: (B, 2).
    Returns (out, loc), each (B, 2) in x.dtype.
    """
    B, H = x.shape
    out_dtype = x.dtype
    # TODO(synk): general-H fallback (feed a pre-transposed (H, B) x from
    # upstream) is not implemented; this path needs H to divide the 128 lanes.
    assert 128 % H == 0, "location_net_forward requires h_hidden to divide 128"
    R = 128 // H                     # batch elements packed per 128-lane row
    C = 2 * R                        # packed output columns per grouped row

    # ---- tiling of the grouped-batch (sublane) axis -------------------------
    Bg = pl.cdiv(B, R)                                   # grouped rows needed
    TG = max(block_b // R, 8)                            # grouped rows / tile
    TG = min(_round_up(TG, 8), _round_up(Bg, 8))         # 8-sublane aligned
    Bgp = _round_up(Bg, TG)
    Bp = Bgp * R
    grid = (Bgp // TG,)

    # ---- free layout plumbing (reshapes only; pad only when B is ragged) ----
    if Bp != B:
        # Ragged batch: this pad is an extra HBM pass over x; keep B a multiple
        # of R * TG upstream to stay off this path when it matters.
        x = jnp.pad(x, ((0, Bp - B), (0, 0)))
        noise = jnp.pad(noise, ((0, Bp - B), (0, 0)))
    xg = x.reshape(Bgp, R * H)                           # (Bgp, 128), metadata only
    ng = noise.reshape(Bgp, C)                           # (Bgp, 2R), metadata only
    wb = jnp.kron(jnp.eye(R, dtype=w.dtype), w.T).astype(x.dtype)   # (128, 2R)
    b8 = jnp.tile(b.astype(jnp.float32), R).reshape(1, C)           # (1, 2R)

    # ---- VMEM budget: actual lane-padded double buffers + ~25% slack --------
    lane = 128
    x_it = jnp.dtype(x.dtype).itemsize
    n_it = jnp.dtype(noise.dtype).itemsize
    o_it = jnp.dtype(out_dtype).itemsize
    buf_bytes = (2 * TG * lane * x_it                    # x (double-buffered)
                 + 2 * TG * lane * n_it                  # noise (lane-padded)
                 + 2 * 2 * TG * lane * o_it              # out + loc (lane-padded)
                 + (lane * C + C) * 4)                   # resident weight + bias
    vmem_limit = min(max(int(buf_bytes * 1.25) + (1 << 20), 16 * 1024 * 1024),
                     128 * 1024 * 1024)

    cost = pl.CostEstimate(
        flops=2 * Bgp * lane * C + 4 * Bgp * C,
        transcendentals=2 * Bgp * C,
        bytes_accessed=(Bgp * lane * x_it + Bgp * C * n_it
                        + 2 * Bgp * C * o_it + lane * C * x_it + C * 4),
    )

    out_g, loc_g = pl.pallas_call(
        _location_kernel,
        out_shape=(jax.ShapeDtypeStruct((Bgp, C), out_dtype),
                   jax.ShapeDtypeStruct((Bgp, C), out_dtype)),
        grid=grid,
        in_specs=[
            pl.BlockSpec((R * H, C), lambda i: (0, 0)),  # block-diag weight (resident)
            pl.BlockSpec((1, C), lambda i: (0, 0)),      # bias (resident)
            pl.BlockSpec((TG, R * H), lambda i: (i, 0)), # x stream (dominant)
            pl.BlockSpec((TG, C), lambda i: (i, 0)),     # noise stream
        ],
        out_specs=(pl.BlockSpec((TG, C), lambda i: (i, 0)),   # out
                   pl.BlockSpec((TG, C), lambda i: (i, 0))),  # loc
        compiler_params=pltpu.CompilerParams(
            dimension_semantics=("parallel",),           # megacore batch sharding
            vmem_limit_bytes=vmem_limit,
        ),
        cost_estimate=cost,
    )(wb, b8, xg, ng)

    out = out_g.reshape(Bp, 2)[:B]       # metadata reshape + cheap row slice
    loc = loc_g.reshape(Bp, 2)[:B]
    return out, loc


def init_params(key, h_hidden):
    """Deterministic init matching nn.Linear(h_hidden, 2) shapes.

    PyTorch default: U(-1/sqrt(fan_in), 1/sqrt(fan_in)) for weight and bias.
    """
    kw, kb = jax.random.split(key)
    bound = 1.0 / (float(h_hidden) ** 0.5)
    w = jax.random.uniform(kw, (2, h_hidden), jnp.float32, -bound, bound)  # (out, in)
    b = jax.random.uniform(kb, (2,), jnp.float32, -bound, bound)
    return w, b


if __name__ == "__main__":
    B = 512        # batch
    H = 32         # h_hidden
    STD_DEV = 0.1  # locationNet std_dev

    key = jax.random.PRNGKey(0)
    k_x, k_p, k_n = jax.random.split(key, 3)

    x = jax.random.normal(k_x, (B, H), jnp.float32)
    w, b = init_params(k_p, H)
    # noise.data.normal_(std=std_dev): zero-mean Gaussian with std = STD_DEV,
    # sampled host-side with the JAX PRNG so the reference check is exact;
    # the add + tanh happen inside the kernel.
    noise = STD_DEV * jax.random.normal(k_n, (B, 2), jnp.float32)

    out_ref = jnp.tanh(x @ w.T + b)
    loc_ref = jnp.tanh(out_ref + noise)

    # 1) default tile: small B collapses to a single-step grid (no overhead).
    out, loc = location_net_forward(x, w, b, noise)
    jax.block_until_ready((out, loc))
    assert out.shape == (B, 2) and loc.shape == (B, 2)
    assert jnp.allclose(out, out_ref, atol=1e-4, rtol=1e-4), "out mismatch"
    assert jnp.allclose(loc, loc_ref, atol=1e-4, rtol=1e-4), "loc mismatch"

    # 2) small tile: exercises the multi-step pipelined / parallel grid path.
    out2, loc2 = location_net_forward(x, w, b, noise, block_b=128)
    jax.block_until_ready((out2, loc2))
    assert jnp.allclose(out2, out_ref, atol=1e-4, rtol=1e-4), "tiled out mismatch"
    assert jnp.allclose(loc2, loc_ref, atol=1e-4, rtol=1e-4), "tiled loc mismatch"

    # 3) ragged batch: exercises the padded edge-tile path.
    Br = 200
    out3, loc3 = location_net_forward(x[:Br], w, b, noise[:Br], block_b=128)
    jax.block_until_ready((out3, loc3))
    assert out3.shape == (Br, 2) and loc3.shape == (Br, 2)
    assert jnp.allclose(out3, out_ref[:Br], atol=1e-4, rtol=1e-4), "ragged out mismatch"
    assert jnp.allclose(loc3, loc_ref[:Br], atol=1e-4, rtol=1e-4), "ragged loc mismatch"

    print("KERNEL_OK")
</pallas_src>

<mosaic_0001>
module attributes {stable_mosaic.version = 11 : i64} {
  func.func @_location_kernel(%arg0: i32, %arg1: memref<128x8xf32, #tpu.memory_space<vmem>>, %arg2: memref<1x8xf32, #tpu.memory_space<vmem>>, %arg3: memref<128x128xf32, #tpu.memory_space<vmem>>, %arg4: memref<128x8xf32, #tpu.memory_space<vmem>>, %arg5: memref<128x8xf32, #tpu.memory_space<vmem>>, %arg6: memref<128x8xf32, #tpu.memory_space<vmem>>) attributes {dimension_semantics = [#tpu.dimension_semantics<parallel>], iteration_bounds = array<i64: 1>, scalar_prefetch = 0 : i64, scratch_operands = 0 : i64, tpu.core_type = #tpu.core_type<tc>, window_params = [{pipeline_mode = #tpu.pipeline_mode<synchronous>, transform_indices = @transform_0, window_bounds = array<i64: 128, 8>}, {pipeline_mode = #tpu.pipeline_mode<synchronous>, transform_indices = @transform_1, window_bounds = array<i64: 1, 8>}, {transform_indices = @transform_2, window_bounds = array<i64: 128, 128>}, {transform_indices = @transform_3, window_bounds = array<i64: 128, 8>}, {transform_indices = @transform_4, window_bounds = array<i64: 128, 8>}, {transform_indices = @transform_5, window_bounds = array<i64: 128, 8>}]} {
    %c0 = arith.constant 0 : index
    %c0_0 = arith.constant 0 : index
    %0 = vector.load %arg3[%c0, %c0_0] : memref<128x128xf32, #tpu.memory_space<vmem>>, vector<128x128xf32>
    %c0_1 = arith.constant 0 : index
    %c0_2 = arith.constant 0 : index
    %1 = vector.load %arg1[%c0_1, %c0_2] : memref<128x8xf32, #tpu.memory_space<vmem>>, vector<128x8xf32>
    %cst = arith.constant dense<0.000000e+00> : vector<128x8xf32>
    %2 = tpu.matmul %0, %1, %cst {dimension_numbers = #tpu.dot_dimension_numbers<[1], [0], [0], [1], [0, 0, 1, 1], [], []>} : vector<128x128xf32>, vector<128x8xf32>, vector<128x8xf32> -> vector<128x8xf32>
    %c0_3 = arith.constant 0 : index
    %c0_4 = arith.constant 0 : index
    %3 = vector.load %arg2[%c0_3, %c0_4] : memref<1x8xf32, #tpu.memory_space<vmem>>, vector<1x8xf32>
    %4 = vector.broadcast %3 : vector<1x8xf32> to vector<128x8xf32>
    %5 = arith.addf %2, %4 : vector<128x8xf32>
    %6 = math.tanh %5 : vector<128x8xf32>
    %c0_5 = arith.constant 0 : index
    %c0_6 = arith.constant 0 : index
    %7 = vector.load %arg4[%c0_5, %c0_6] : memref<128x8xf32, #tpu.memory_space<vmem>>, vector<128x8xf32>
    %8 = arith.addf %6, %7 : vector<128x8xf32>
    %9 = math.tanh %8 : vector<128x8xf32>
    %c0_7 = arith.constant 0 : index
    %c0_8 = arith.constant 0 : index
    %10 = vector.load %arg5[%c0_7, %c0_8] : memref<128x8xf32, #tpu.memory_space<vmem>>, vector<128x8xf32>
    tpu.vector_store %arg5[%c0_7, %c0_8], %6 {strides = array<i32>} : memref<128x8xf32, #tpu.memory_space<vmem>>, vector<128x8xf32>,
    %c0_9 = arith.constant 0 : index
    %c0_10 = arith.constant 0 : index
    %11 = vector.load %arg6[%c0_9, %c0_10] : memref<128x8xf32, #tpu.memory_space<vmem>>, vector<128x8xf32>
    tpu.vector_store %arg6[%c0_9, %c0_10], %9 {strides = array<i32>} : memref<128x8xf32, #tpu.memory_space<vmem>>, vector<128x8xf32>,
    return
  }
  func.func @transform_0(%arg0: i32) -> (i32, i32) {
    %c0_i32 = arith.constant 0 : i32
    %c0_i32_0 = arith.constant 0 : i32
    %c0_i32_1 = arith.constant 0 : i32
    return %c0_i32, %c0_i32_0 : i32, i32
  }
  func.func @transform_1(%arg0: i32) -> (i32, i32) {
    %c0_i32 = arith.constant 0 : i32
    %c0_i32_0 = arith.constant 0 : i32
    %c0_i32_1 = arith.constant 0 : i32
    return %c0_i32, %c0_i32_0 : i32, i32
  }
  func.func @transform_2(%arg0: i32) -> (i32, i32) {
    %c0_i32 = arith.constant 0 : i32
    %c0_i32_0 = arith.constant 0 : i32
    return %arg0, %c0_i32 : i32, i32
  }
  func.func @transform_3(%arg0: i32) -> (i32, i32) {
    %c0_i32 = arith.constant 0 : i32
    %c0_i32_0 = arith.constant 0 : i32
    return %arg0, %c0_i32 : i32, i32
  }
  func.func @transform_4(%arg0: i32) -> (i32, i32) {
    %c0_i32 = arith.constant 0 : i32
    %c0_i32_0 = arith.constant 0 : i32
    return %arg0, %c0_i32 : i32, i32
  }
  func.func @transform_5(%arg0: i32) -> (i32, i32) {
    %c0_i32 = arith.constant 0 : i32
    %c0_i32_0 = arith.constant 0 : i32
    return %arg0, %c0_i32 : i32, i32
  }
}

</mosaic_0001>

<llo_original>
// kernel: tpu_custom_call.1
$region0: #{tpu_custom_call.1}
  #allocation0 [shape = 'u32[]', space=smem, size = 0x4, offset = 0x4, fixed_abs, tag = 'smem constant byte address 0x4 - core index']
  #allocation1 [shape = 'u32[144,128]{1,0:T(1,128)}', space=vmem, size = 0x12000, scoped, tag = 'internal scratch']
  %s0 = inlined_call_operand.vmem [shape: f32[128,8], index: 0, kind: input, shape index: {}]
  %s1 = inlined_call_operand.vmem [shape: f32[1,8], index: 1, kind: input, shape index: {}]
  %s2 = inlined_call_operand.vmem [shape: f32[128,128], index: 2, kind: input, shape index: {}]
  %s3 = inlined_call_operand.vmem [shape: f32[128,8], index: 3, kind: input, shape index: {}]
  %s4 = inlined_call_operand.vmem [shape: f32[128,8], index: 4, kind: output, shape index: {0}]
  %s5 = inlined_call_operand.vmem [shape: f32[128,8], index: 5, kind: output, shape index: {1}]
  %6 = xla_tuple %s4, %s5
  %s7 = sld [smem:[#allocation0]]
  $region34: #{tpu_custom_call.1} parent=0
    _
  %s9 = ssub.s32 1, %s7
  %s10 = scalar_select 0, %s9, %s7
  // Predicated region
  $region2: #{tpu_custom_call.1} parent=0 // pred_check
    _
  $region3: #{tpu_custom_call.1} parent=0 // pred_check_branch
    %12 = sbr.rel (0) target = $region5
  $region4: #{tpu_custom_call.1} parent=0 // pred_region
    _
  $region5: #{tpu_custom_call.1} parent=0 // pred_fallthru
    _
  // Predicated region
  $region6: #{tpu_custom_call.1} parent=0 // pred_check
    _
  $region7: #{tpu_custom_call.1} parent=0 // pred_check_branch
    %14 = sbr.rel (0) target = $region9
  $region8: #{tpu_custom_call.1} parent=0 // pred_region
    _
  $region9: #{tpu_custom_call.1} parent=0 // pred_fallthru
    _
  // Predicated region
  $region10: #{tpu_custom_call.1} parent=0 // pred_check
    _
  $region11: #{tpu_custom_call.1} parent=0 // pred_check_branch
    %16 = sbr.rel (0) target = $region13
  $region12: #{tpu_custom_call.1} parent=0 // pred_region
    _
  $region13: #{tpu_custom_call.1} parent=0 // pred_fallthru
    _
  // Predicated region
  $region14: #{tpu_custom_call.1} parent=0 // pred_check
    _
  $region15: #{tpu_custom_call.1} parent=0 // pred_check_branch
    %18 = sbr.rel (0) target = $region17
  $region16: #{tpu_custom_call.1} parent=0 // pred_region
    _
  $region17: #{tpu_custom_call.1} parent=0 // pred_fallthru
    _
  %v19 = vld [vmem:[%s2] sm:$0xff]
  %v20 = vld [vmem:[%s2 + $0x8] sm:$0xff]
  %v21 = vld [vmem:[%s2 + $0x10] sm:$0xff]
  %v22 = vld [vmem:[%s2 + $0x18] sm:$0xff]
  %v23 = vld [vmem:[%s2 + $0x20] sm:$0xff]
  %v24 = vld [vmem:[%s2 + $0x28] sm:$0xff]
  %v25 = vld [vmem:[%s2 + $0x30] sm:$0xff]
  %v26 = vld [vmem:[%s2 + $0x38] sm:$0xff]
  %v27 = vld [vmem:[%s2 + $0x40] sm:$0xff]
  %v28 = vld [vmem:[%s2 + $0x48] sm:$0xff]
  %v29 = vld [vmem:[%s2 + $0x50] sm:$0xff]
  %v30 = vld [vmem:[%s2 + $0x58] sm:$0xff]
  %v31 = vld [vmem:[%s2 + $0x60] sm:$0xff]
  %v32 = vld [vmem:[%s2 + $0x68] sm:$0xff]
  %v33 = vld [vmem:[%s2 + $0x70] sm:$0xff]
  %v34 = vld [vmem:[%s2 + $0x78] sm:$0xff]
  %v35 = vld [vmem:[%s0] sm:$0xff]
  %v36 = vld [vmem:[%s0 + $0x8] sm:$0xff]
  %v37 = vld [vmem:[%s0 + $0x10] sm:$0xff]
  %v38 = vld [vmem:[%s0 + $0x18] sm:$0xff]
  %v39 = vld [vmem:[%s0 + $0x20] sm:$0xff]
  %v40 = vld [vmem:[%s0 + $0x28] sm:$0xff]
  %v41 = vld [vmem:[%s0 + $0x30] sm:$0xff]
  %v42 = vld [vmem:[%s0 + $0x38] sm:$0xff]
  %v43 = vld [vmem:[%s0 + $0x40] sm:$0xff]
  %v44 = vld [vmem:[%s0 + $0x48] sm:$0xff]
  %v45 = vld [vmem:[%s0 + $0x50] sm:$0xff]
  %v46 = vld [vmem:[%s0 + $0x58] sm:$0xff]
  %v47 = vld [vmem:[%s0 + $0x60] sm:$0xff]
  %v48 = vld [vmem:[%s0 + $0x68] sm:$0xff]
  %v49 = vld [vmem:[%s0 + $0x70] sm:$0xff]
  %v50 = vld [vmem:[%s0 + $0x78] sm:$0xff]
  %v51 = vld [vmem:[%s1] sm:$0x1]
  %v53 = vlaneseq
  %v54 = vshrl.u32 %v53, 7
  %v55 = vsub.s32 0, %v54
  %v56 = vrot.slane %v51, %v55
  %58 = vmatprep.subr.mxu0 0.0
  %59 = vmatpush1.msra.mxu0 %v35
  %60 = vmatprep.subr.mxu0 0.0
  %61 = vmatpush1.msra.mxu0 %v36
  %62 = vmatprep.subr.mxu0 0.0
  %63 = vmatpush1.msra.mxu0 %v37
  %64 = vmatprep.subr.mxu0 0.0
  %65 = vmatpush1.msra.mxu0 %v38
  %66 = vmatprep.subr.mxu0 0.0
  %67 = vmatpush1.msra.mxu0 %v39
  %68 = vmatprep.subr.mxu0 0.0
  %69 = vmatpush1.msra.mxu0 %v40
  %70 = vmatprep.subr.mxu0 0.0
  %71 = vmatpush1.msra.mxu0 %v41
  %72 = vmatprep.subr.mxu0 0.0
  %73 = vmatpush1.msra.mxu0 %v42
  %74 = vmatprep.subr.mxu0 0.0
  %75 = vmatpush1.msra.mxu0 %v43
  %76 = vmatprep.subr.mxu0 0.0
  %77 = vmatpush1.msra.mxu0 %v44
  %78 = vmatprep.subr.mxu0 0.0
  %79 = vmatpush1.msra.mxu0 %v45
  %80 = vmatprep.subr.mxu0 0.0
  %81 = vmatpush1.msra.mxu0 %v46
  %82 = vmatprep.subr.mxu0 0.0
  %83 = vmatpush1.msra.mxu0 %v47
  %84 = vmatprep.subr.mxu0 0.0
  %85 = vmatpush1.msra.mxu0 %v48
  %86 = vmatprep.subr.mxu0 0.0
  %87 = vmatpush1.msra.mxu0 %v49
  %88 = vmatprep.subr.mxu0 0.0
  %89 = vmatpush1.msra.mxu0 %v50
  %90 = vmatprep.subr.mxu0 0.0
  %91 = vmatpush1.msra.mxu0 0.0
  %92 = vmatprep.subr.mxu0 0.0
  %93 = vmatpush1.msra.mxu0 0.0
  %94 = vmatprep.subr.mxu0 0.0
  %95 = vmatpush1.msra.mxu0 0.0
  %96 = vmatprep.subr.mxu0 0.0
  %97 = vmatpush1.msra.mxu0 0.0
  %98 = vmatprep.subr.mxu0 0.0
  %99 = vmatpush1.msra.mxu0 0.0
  %100 = vmatprep.subr.mxu0 0.0
  %101 = vmatpush1.msra.mxu0 0.0
  %102 = vmatprep.subr.mxu0 0.0
  %103 = vmatpush1.msra.mxu0 0.0
  %104 = vmatprep.subr.mxu0 0.0
  %105 = vmatpush1.msra.mxu0 0.0
  %106 = vmatprep.subr.mxu0 0.0
  %107 = vmatpush1.msra.mxu0 0.0
  %108 = vmatprep.subr.mxu0 0.0
  %109 = vmatpush1.msra.mxu0 0.0
  %110 = vmatprep.subr.mxu0 0.0
  %111 = vmatpush1.msra.mxu0 0.0
  %112 = vmatprep.subr.mxu0 0.0
  %113 = vmatpush1.msra.mxu0 0.0
  %114 = vmatprep.subr.mxu0 0.0
  %115 = vmatpush1.msra.mxu0 0.0
  %116 = vmatprep.subr.mxu0 0.0
  %117 = vmatpush1.msra.mxu0 0.0
  %118 = vmatprep.subr.mxu0 0.0
  %119 = vmatpush1.msra.mxu0 0.0
  %120 = vmatprep.subr.mxu0 0.0
  %121 = vmatpush1.msra.mxu0 0.0
  %122 = vmatprep.mubr.f32.mxu0 0.0
  %123 = vmatmul.mubr.f32.gmra.mrb[0].mxu0 %v19
  %v124 = vpop.f32.mrb[0].mxu0
  %v125 = vadd.f32 %v56, %v124
  %v126 = vpop.f32.mrb[0].mxu0
  %127 = vmatprep.mubr.f32.mxu0 0.0
  %128 = vmatmul.mubr.f32.gmra.mrb[0].mxu0 %v20
  %v129 = vpop.f32.mrb[0].mxu0
  %v130 = vadd.f32 %v56, %v129
  %v131 = vpop.f32.mrb[0].mxu0
  %132 = vmatprep.mubr.f32.mxu0 0.0
  %133 = vmatmul.mubr.f32.gmra.mrb[0].mxu0 %v21
  %v134 = vpop.f32.mrb[0].mxu0
  %v135 = vadd.f32 %v56, %v134
  %v136 = vpop.f32.mrb[0].mxu0
  %137 = vmatprep.mubr.f32.mxu0 0.0
  %138 = vmatmul.mubr.f32.gmra.mrb[0].mxu0 %v22
  %v139 = vpop.f32.mrb[0].mxu0
  %v140 = vadd.f32 %v56, %v139
  %v141 = vpop.f32.mrb[0].mxu0
  %142 = vmatprep.mubr.f32.mxu0 0.0
  %143 = vmatmul.mubr.f32.gmra.mrb[0].mxu0 %v23
  %v144 = vpop.f32.mrb[0].mxu0
  %v145 = vadd.f32 %v56, %v144
  %v146 = vpop.f32.mrb[0].mxu0
  %147 = vmatprep.mubr.f32.mxu0 0.0
  %148 = vmatmul.mubr.f32.gmra.mrb[0].mxu0 %v24
  %v149 = vpop.f32.mrb[0].mxu0
  %v150 = vadd.f32 %v56, %v149
  %v151 = vpop.f32.mrb[0].mxu0
  %152 = vmatprep.mubr.f32.mxu0 0.0
  %153 = vmatmul.mubr.f32.gmra.mrb[0].mxu0 %v25
  %v154 = vpop.f32.mrb[0].mxu0
  %v155 = vadd.f32 %v56, %v154
  %v156 = vpop.f32.mrb[0].mxu0
  %157 = vmatprep.mubr.f32.mxu0 0.0
  %158 = vmatmul.mubr.f32.gmra.mrb[0].mxu0 %v26
  %v159 = vpop.f32.mrb[0].mxu0
  %v160 = vadd.f32 %v56, %v159
  %v161 = vpop.f32.mrb[0].mxu0
  %162 = vmatprep.mubr.f32.mxu0 0.0
  %163 = vmatmul.mubr.f32.gmra.mrb[0].mxu0 %v27
  %v164 = vpop.f32.mrb[0].mxu0
  %v165 = vadd.f32 %v56, %v164
  %v166 = vpop.f32.mrb[0].mxu0
  %167 = vmatprep.mubr.f32.mxu0 0.0
  %168 = vmatmul.mubr.f32.gmra.mrb[0].mxu0 %v28
  %v169 = vpop.f32.mrb[0].mxu0
  %v170 = vadd.f32 %v56, %v169
  %v171 = vpop.f32.mrb[0].mxu0
  %172 = vmatprep.mubr.f32.mxu0 0.0
  %173 = vmatmul.mubr.f32.gmra.mrb[0].mxu0 %v29
  %v174 = vpop.f32.mrb[0].mxu0
  %v175 = vadd.f32 %v56, %v174
  %v176 = vpop.f32.mrb[0].mxu0
  %177 = vmatprep.mubr.f32.mxu0 0.0
  %178 = vmatmul.mubr.f32.gmra.mrb[0].mxu0 %v30
  %v179 = vpop.f32.mrb[0].mxu0
  %v180 = vadd.f32 %v56, %v179
  %v181 = vpop.f32.mrb[0].mxu0
  %182 = vmatprep.mubr.f32.mxu0 0.0
  %183 = vmatmul.mubr.f32.gmra.mrb[0].mxu0 %v31
  %v184 = vpop.f32.mrb[0].mxu0
  %v185 = vadd.f32 %v56, %v184
  %v186 = vpop.f32.mrb[0].mxu0
  %187 = vmatprep.mubr.f32.mxu0 0.0
  %188 = vmatmul.mubr.f32.gmra.mrb[0].mxu0 %v32
  %v189 = vpop.f32.mrb[0].mxu0
  %v190 = vadd.f32 %v56, %v189
  %v191 = vpop.f32.mrb[0].mxu0
  %192 = vmatprep.mubr.f32.mxu0 0.0
  %193 = vmatmul.mubr.f32.gmra.mrb[0].mxu0 %v33
  %v194 = vpop.f32.mrb[0].mxu0
  %v195 = vadd.f32 %v56, %v194
  %v196 = vpop.f32.mrb[0].mxu0
  %197 = vmatprep.mubr.f32.mxu0 0.0
  %198 = vmatmul.mubr.f32.gmra.mrb[0].mxu0 %v34
  %v199 = vpop.f32.mrb[0].mxu0
  %v200 = vadd.f32 %v56, %v199
  %v201 = vpop.f32.mrb[0].mxu0
  %202 = vdwg.mxu0
  %v203 = vtanh.pop %v125
  %v204 = vtanh.pop %v130
  %v205 = vtanh.pop %v135
  %v206 = vtanh.pop %v140
  %v207 = vtanh.pop %v145
  %v208 = vtanh.pop %v150
  %v209 = vtanh.pop %v155
  %v210 = vtanh.pop %v160
  %v211 = vtanh.pop %v165
  %v212 = vtanh.pop %v170
  %v213 = vtanh.pop %v175
  %v214 = vtanh.pop %v180
  %v215 = vtanh.pop %v185
  %v216 = vtanh.pop %v190
  %v217 = vtanh.pop %v195
  %v218 = vtanh.pop %v200
  %v219 = vld [vmem:[%s3] sm:$0xff]
  %v220 = vld [vmem:[%s3 + $0x8] sm:$0xff]
  %v221 = vld [vmem:[%s3 + $0x10] sm:$0xff]
  %v222 = vld [vmem:[%s3 + $0x18] sm:$0xff]
  %v223 = vld [vmem:[%s3 + $0x20] sm:$0xff]
  %v224 = vld [vmem:[%s3 + $0x28] sm:$0xff]
  %v225 = vld [vmem:[%s3 + $0x30] sm:$0xff]
  %v226 = vld [vmem:[%s3 + $0x38] sm:$0xff]
  %v227 = vld [vmem:[%s3 + $0x40] sm:$0xff]
  %v228 = vld [vmem:[%s3 + $0x48] sm:$0xff]
  %v229 = vld [vmem:[%s3 + $0x50] sm:$0xff]
  %v230 = vld [vmem:[%s3 + $0x58] sm:$0xff]
  %v231 = vld [vmem:[%s3 + $0x60] sm:$0xff]
  %v232 = vld [vmem:[%s3 + $0x68] sm:$0xff]
  %v233 = vld [vmem:[%s3 + $0x70] sm:$0xff]
  %v234 = vld [vmem:[%s3 + $0x78] sm:$0xff]
  %v235 = vadd.f32 %v203, %v219
  %v236 = vadd.f32 %v204, %v220
  %v237 = vadd.f32 %v205, %v221
  %v238 = vadd.f32 %v206, %v222
  %v239 = vadd.f32 %v207, %v223
  %v240 = vadd.f32 %v208, %v224
  %v241 = vadd.f32 %v209, %v225
  %v242 = vadd.f32 %v210, %v226
  %v243 = vadd.f32 %v211, %v227
  %v244 = vadd.f32 %v212, %v228
  %v245 = vadd.f32 %v213, %v229
  %v246 = vadd.f32 %v214, %v230
  %v247 = vadd.f32 %v215, %v231
  %v248 = vadd.f32 %v216, %v232
  %v249 = vadd.f32 %v217, %v233
  %v250 = vadd.f32 %v218, %v234
  %v251 = vtanh.pop %v235
  %v252 = vtanh.pop %v236
  %v253 = vtanh.pop %v237
  %v254 = vtanh.pop %v238
  %v255 = vtanh.pop %v239
  %v256 = vtanh.pop %v240
  %v257 = vtanh.pop %v241
  %v258 = vtanh.pop %v242
  %v259 = vtanh.pop %v243
  %v260 = vtanh.pop %v244
  %v261 = vtanh.pop %v245
  %v262 = vtanh.pop %v246
  %v263 = vtanh.pop %v247
  %v264 = vtanh.pop %v248
  %v265 = vtanh.pop %v249
  %v266 = vtanh.pop %v250
  %vm267 = vcmask 64512
  %268 = vst.msk [vmem:[%s4] sm:$0xff] %vm267, %v203
  %269 = vst.msk [vmem:[%s4 + $0x8] sm:$0xff] %vm267, %v204
  %270 = vst.msk [vmem:[%s4 + $0x10] sm:$0xff] %vm267, %v205
  %271 = vst.msk [vmem:[%s4 + $0x18] sm:$0xff] %vm267, %v206
  %272 = vst.msk [vmem:[%s4 + $0x20] sm:$0xff] %vm267, %v207
  %273 = vst.msk [vmem:[%s4 + $0x28] sm:$0xff] %vm267, %v208
  %274 = vst.msk [vmem:[%s4 + $0x30] sm:$0xff] %vm267, %v209
  %275 = vst.msk [vmem:[%s4 + $0x38] sm:$0xff] %vm267, %v210
  %276 = vst.msk [vmem:[%s4 + $0x40] sm:$0xff] %vm267, %v211
  %277 = vst.msk [vmem:[%s4 + $0x48] sm:$0xff] %vm267, %v212
  %278 = vst.msk [vmem:[%s4 + $0x50] sm:$0xff] %vm267, %v213
  %279 = vst.msk [vmem:[%s4 + $0x58] sm:$0xff] %vm267, %v214
  %280 = vst.msk [vmem:[%s4 + $0x60] sm:$0xff] %vm267, %v215
  %281 = vst.msk [vmem:[%s4 + $0x68] sm:$0xff] %vm267, %v216
  %282 = vst.msk [vmem:[%s4 + $0x70] sm:$0xff] %vm267, %v217
  %283 = vst.msk [vmem:[%s4 + $0x78] sm:$0xff] %vm267, %v218
  %284 = vst.msk [vmem:[%s5] sm:$0xff] %vm267, %v251
  %285 = vst.msk [vmem:[%s5 + $0x8] sm:$0xff] %vm267, %v252
  %286 = vst.msk [vmem:[%s5 + $0x10] sm:$0xff] %vm267, %v253
  %287 = vst.msk [vmem:[%s5 + $0x18] sm:$0xff] %vm267, %v254
  %288 = vst.msk [vmem:[%s5 + $0x20] sm:$0xff] %vm267, %v255
  %289 = vst.msk [vmem:[%s5 + $0x28] sm:$0xff] %vm267, %v256
  %290 = vst.msk [vmem:[%s5 + $0x30] sm:$0xff] %vm267, %v257
  %291 = vst.msk [vmem:[%s5 + $0x38] sm:$0xff] %vm267, %v258
  %292 = vst.msk [vmem:[%s5 + $0x40] sm:$0xff] %vm267, %v259
  %293 = vst.msk [vmem:[%s5 + $0x48] sm:$0xff] %vm267, %v260
  %294 = vst.msk [vmem:[%s5 + $0x50] sm:$0xff] %vm267, %v261
  %295 = vst.msk [vmem:[%s5 + $0x58] sm:$0xff] %vm267, %v262
  %296 = vst.msk [vmem:[%s5 + $0x60] sm:$0xff] %vm267, %v263
  %297 = vst.msk [vmem:[%s5 + $0x68] sm:$0xff] %vm267, %v264
  %298 = vst.msk [vmem:[%s5 + $0x70] sm:$0xff] %vm267, %v265
  %299 = vst.msk [vmem:[%s5 + $0x78] sm:$0xff] %vm267, %v266
  // Predicated region
  $region18: #{tpu_custom_call.1} parent=0 // pred_check
    _
  $region19: #{tpu_custom_call.1} parent=0 // pred_check_branch
    %301 = sbr.rel (0) target = $region21
  $region20: #{tpu_custom_call.1} parent=0 // pred_region
    _
  $region21: #{tpu_custom_call.1} parent=0 // pred_fallthru
    _
  // Predicated region
  $region22: #{tpu_custom_call.1} parent=0 // pred_check
    _
  $region23: #{tpu_custom_call.1} parent=0 // pred_check_branch
    %303 = sbr.rel (0) target = $region25
  $region24: #{tpu_custom_call.1} parent=0 // pred_region
    _
  $region25: #{tpu_custom_call.1} parent=0 // pred_fallthru
    _
  // Predicated region
  $region26: #{tpu_custom_call.1} parent=0 // pred_check
    _
  $region27: #{tpu_custom_call.1} parent=0 // pred_check_branch
    %305 = sbr.rel (0) target = $region29
  $region28: #{tpu_custom_call.1} parent=0 // pred_region
    _
  $region29: #{tpu_custom_call.1} parent=0 // pred_fallthru
    _
  // Predicated region
  $region30: #{tpu_custom_call.1} parent=0 // pred_check
    _
  $region31: #{tpu_custom_call.1} parent=0 // pred_check_branch
    %307 = sbr.rel (0) target = $region33
  $region32: #{tpu_custom_call.1} parent=0 // pred_region
    _
  $region33: #{tpu_custom_call.1} parent=0 // pred_fallthru
    _

</llo_original>
